<compile_context>
chip_gen: v7x
topology: tpu7x:2x2x1
jax: 0.10.0
libtpu: 0.0.40
codegen_flags: <defaults>
</compile_context>

<pallas_src>
import functools
import math

import jax
import jax.numpy as jnp
from jax.experimental import pallas as pl
from jax.experimental.pallas import tpu as pltpu


def _cdiv(a, b):
    return (a + b - 1) // b


def _round_up(x, m):
    return _cdiv(x, m) * m


def _layernorm_kernel(x_ref, gamma_ref, beta_ref, o_ref, *, eps, n):
    # x_ref / o_ref: (row_tile, D); gamma_ref / beta_ref: (1, D) f32.
    x = x_ref[...].astype(jnp.float32)

    # Two-pass, mean-shifted variance (tile already in VMEM -> free, accurate).
    mean = jnp.sum(x, axis=-1, keepdims=True) * (1.0 / n)
    diff = x - mean
    denom = max(n - 1, 1)                              # torch.std default: unbiased (N-1)
    var = jnp.sum(diff * diff, axis=-1, keepdims=True) * (1.0 / denom)
    std = jnp.sqrt(var)

    # Per-row reciprocal of (std + eps): EUP slot, frees the VALU.
    inv = pl.reciprocal(std + eps, approx=False)       # (rows, 1)

    gamma = gamma_ref[...]                             # (1, D) f32, broadcasts over rows
    beta = beta_ref[...]
    o_ref[...] = (gamma * (diff * inv) + beta).astype(o_ref.dtype)


def layer_norm(x, gamma, beta, eps=1e-12, row_tile=None):
    """x: (..., D). Returns gamma * (x - mean) / (unbiased_std + eps) + beta."""
    orig_shape = x.shape
    D = int(orig_shape[-1])
    rows = int(math.prod(orig_shape[:-1]))

    x2 = x.reshape(rows, D)
    gamma2 = gamma.reshape(1, D).astype(jnp.float32)
    beta2 = beta.reshape(1, D).astype(jnp.float32)

    itemsize = jnp.dtype(x.dtype).itemsize
    sub = max(8, 32 // itemsize)          # sublane multiple: f32 -> 8, bf16 -> 16

    # Per-generation budget (v5e/v6e: 128 MiB VMEM, v7x: 64 MiB per TensorCore).
    try:
        vmem_cap = int(getattr(pltpu.get_tpu_info(), "vmem_capacity_bytes",
                               64 * 1024 * 1024))
    except Exception:  # pragma: no cover - conservative default off-TPU
        vmem_cap = 64 * 1024 * 1024
    if vmem_cap >= 96 * 1024 * 1024:      # v5e / v6e
        target_block_bytes = 8 * 1024 * 1024
        vmem_limit = 64 * 1024 * 1024
    else:                                 # v7x (smaller VMEM per core)
        target_block_bytes = 3 * 1024 * 1024
        vmem_limit = 40 * 1024 * 1024

    row_bytes = max(D * itemsize, 1)
    if row_tile is None:
        row_tile = min(1024, target_block_bytes // row_bytes)
        row_tile = max(sub, (row_tile // sub) * sub)
        if row_tile >= rows:
            if rows * row_bytes >= 2 * 1024 * 1024 and rows >= 2 * sub:
                # Big single block: split so the output DMA of step i overlaps
                # the input DMA of step i+1.
                row_tile = _round_up(_cdiv(rows, 2), sub)
            else:
                # Tiny problem: one full-extent block, no padding, no split.
                row_tile = rows
    else:
        row_tile = max(1, min(int(row_tile), rows))
        if row_tile < rows:
            row_tile = max(sub, (row_tile // sub) * sub)

    grid_n = _cdiv(rows, row_tile)
    # Prefer an even number of grid steps so the "parallel" axis balances
    # across the two v7x TensorCores (harmless on single-TC v5e/v6e).
    if grid_n >= 3 and grid_n % 2 == 1:
        cand = _round_up(_cdiv(rows, grid_n + 1), sub)
        if 0 < cand < rows:
            row_tile = cand
            grid_n = _cdiv(rows, row_tile)

    kernel = functools.partial(_layernorm_kernel, eps=float(eps), n=D)

    cost = pl.CostEstimate(
        flops=8 * rows * D,
        transcendentals=2 * rows,
        bytes_accessed=2 * rows * D * itemsize + 2 * D * 4,
    )

    out = pl.pallas_call(
        kernel,
        out_shape=jax.ShapeDtypeStruct((rows, D), x.dtype),
        grid_spec=pltpu.PrefetchScalarGridSpec(
            num_scalar_prefetch=0,
            grid=(grid_n,),
            in_specs=[
                pl.BlockSpec((row_tile, D), lambda i: (i, 0)),
                pl.BlockSpec((1, D), lambda i: (0, 0)),   # grid-invariant gamma
                pl.BlockSpec((1, D), lambda i: (0, 0)),   # grid-invariant beta
            ],
            out_specs=pl.BlockSpec((row_tile, D), lambda i: (i, 0)),
        ),
        compiler_params=pltpu.CompilerParams(
            dimension_semantics=("parallel",),
            vmem_limit_bytes=vmem_limit,
        ),
        cost_estimate=cost,
    )(x2, gamma2, beta2)

    return out.reshape(orig_shape)


def _reference(x, gamma, beta, eps):
    mean = jnp.mean(x, axis=-1, keepdims=True)
    n = x.shape[-1]
    std = jnp.sqrt(jnp.sum((x - mean) ** 2, axis=-1, keepdims=True) / (n - 1))
    return gamma * ((x - mean) / (std + eps)) + beta


if __name__ == "__main__":
    key = jax.random.PRNGKey(0)

    # Shapes implied by the module: (batch, seq, model_dim).
    batch, seq, hidden = 2, 8, 32
    x = jax.random.normal(key, (batch, seq, hidden), dtype=jnp.float32)
    gamma = jnp.ones((hidden,), dtype=jnp.float32)
    beta = jnp.zeros((hidden,), dtype=jnp.float32)

    out = jax.block_until_ready(layer_norm(x, gamma, beta, eps=1e-12))
    ref = _reference(x, gamma, beta, 1e-12)
    assert jnp.allclose(out, ref, atol=1e-5, rtol=1e-5), "mismatch vs reference"

    # Second check: non-tile-aligned rows / non-128 feature dim exercises the
    # partial-final-block path (no HBM padding anywhere).
    k2 = jax.random.PRNGKey(0)
    x2 = jax.random.normal(k2, (4, 5, 48), dtype=jnp.float32)
    g2 = jnp.ones((48,), dtype=jnp.float32)
    b2 = jnp.zeros((48,), dtype=jnp.float32)
    out2 = jax.block_until_ready(layer_norm(x2, g2, b2, eps=1e-12, row_tile=8))
    ref2 = _reference(x2, g2, b2, 1e-12)
    assert jnp.allclose(out2, ref2, atol=1e-5, rtol=1e-5), "mismatch (partial blocks)"

    print("KERNEL_OK")
</pallas_src>

<mosaic_0001>
module attributes {stable_mosaic.version = 11 : i64} {
  func.func @_layernorm_kernel(%arg0: i32, %arg1: memref<16x32xf32, #tpu.memory_space<vmem>>, %arg2: memref<1x32xf32, #tpu.memory_space<vmem>>, %arg3: memref<1x32xf32, #tpu.memory_space<vmem>>, %arg4: memref<16x32xf32, #tpu.memory_space<vmem>>) attributes {dimension_semantics = [#tpu.dimension_semantics<parallel>], iteration_bounds = array<i64: 1>, scalar_prefetch = 0 : i64, scratch_operands = 0 : i64, tpu.core_type = #tpu.core_type<tc>, window_params = [{transform_indices = @transform_0, window_bounds = array<i64: 16, 32>}, {pipeline_mode = #tpu.pipeline_mode<synchronous>, transform_indices = @transform_1, window_bounds = array<i64: 1, 32>}, {pipeline_mode = #tpu.pipeline_mode<synchronous>, transform_indices = @transform_2, window_bounds = array<i64: 1, 32>}, {transform_indices = @transform_3, window_bounds = array<i64: 16, 32>}]} {
    %c0 = arith.constant 0 : index
    %c0_0 = arith.constant 0 : index
    %0 = vector.load %arg1[%c0, %c0_0] : memref<16x32xf32, #tpu.memory_space<vmem>>, vector<16x32xf32>
    %cst = arith.constant dense<0.000000e+00> : vector<16xf32>
    %1 = vector.multi_reduction <add>, %0, %cst [1] : vector<16x32xf32> to vector<16xf32>
    %2 = vector.shape_cast %1 : vector<16xf32> to vector<16x1xf32>
    %cst_1 = arith.constant 3.125000e-02 : f32
    %3 = vector.broadcast %cst_1 : f32 to vector<16x1xf32>
    %4 = arith.mulf %2, %3 : vector<16x1xf32>
    %5 = vector.broadcast %4 : vector<16x1xf32> to vector<16x32xf32>
    %6 = arith.subf %0, %5 : vector<16x32xf32>
    %7 = arith.mulf %6, %6 : vector<16x32xf32>
    %cst_2 = arith.constant dense<0.000000e+00> : vector<16xf32>
    %8 = vector.multi_reduction <add>, %7, %cst_2 [1] : vector<16x32xf32> to vector<16xf32>
    %9 = vector.shape_cast %8 : vector<16xf32> to vector<16x1xf32>
    %cst_3 = arith.constant 0.0322580636 : f32
    %10 = vector.broadcast %cst_3 : f32 to vector<16x1xf32>
    %11 = arith.mulf %9, %10 : vector<16x1xf32>
    %12 = math.sqrt %11 : vector<16x1xf32>
    %cst_4 = arith.constant 9.99999996E-13 : f32
    %13 = vector.broadcast %cst_4 : f32 to vector<16x1xf32>
    %14 = arith.addf %12, %13 : vector<16x1xf32>
    %15 = tpu.reciprocal %14 : vector<16x1xf32> -> vector<16x1xf32>
    %c0_5 = arith.constant 0 : index
    %c0_6 = arith.constant 0 : index
    %16 = vector.load %arg2[%c0_5, %c0_6] : memref<1x32xf32, #tpu.memory_space<vmem>>, vector<1x32xf32>
    %c0_7 = arith.constant 0 : index
    %c0_8 = arith.constant 0 : index
    %17 = vector.load %arg3[%c0_7, %c0_8] : memref<1x32xf32, #tpu.memory_space<vmem>>, vector<1x32xf32>
    %18 = vector.broadcast %15 : vector<16x1xf32> to vector<16x32xf32>
    %19 = arith.mulf %6, %18 : vector<16x32xf32>
    %20 = vector.broadcast %16 : vector<1x32xf32> to vector<16x32xf32>
    %21 = arith.mulf %20, %19 : vector<16x32xf32>
    %22 = vector.broadcast %17 : vector<1x32xf32> to vector<16x32xf32>
    %23 = arith.addf %21, %22 : vector<16x32xf32>
    %c0_9 = arith.constant 0 : index
    %c0_10 = arith.constant 0 : index
    %24 = vector.load %arg4[%c0_9, %c0_10] : memref<16x32xf32, #tpu.memory_space<vmem>>, vector<16x32xf32>
    tpu.vector_store %arg4[%c0_9, %c0_10], %23 {strides = array<i32>} : memref<16x32xf32, #tpu.memory_space<vmem>>, vector<16x32xf32>,
    return
  }
  func.func @transform_0(%arg0: i32) -> (i32, i32) {
    %c0_i32 = arith.constant 0 : i32
    %c0_i32_0 = arith.constant 0 : i32
    return %arg0, %c0_i32 : i32, i32
  }
  func.func @transform_1(%arg0: i32) -> (i32, i32) {
    %c0_i32 = arith.constant 0 : i32
    %c0_i32_0 = arith.constant 0 : i32
    %c0_i32_1 = arith.constant 0 : i32
    return %c0_i32, %c0_i32_0 : i32, i32
  }
  func.func @transform_2(%arg0: i32) -> (i32, i32) {
    %c0_i32 = arith.constant 0 : i32
    %c0_i32_0 = arith.constant 0 : i32
    %c0_i32_1 = arith.constant 0 : i32
    return %c0_i32, %c0_i32_0 : i32, i32
  }
  func.func @transform_3(%arg0: i32) -> (i32, i32) {
    %c0_i32 = arith.constant 0 : i32
    %c0_i32_0 = arith.constant 0 : i32
    return %arg0, %c0_i32 : i32, i32
  }
}

</mosaic_0001>

<llo_original>
// kernel: tpu_custom_call.1
$region0: #{tpu_custom_call.1}
  #allocation0 [shape = 'u32[]', space=smem, size = 0x4, offset = 0x4, fixed_abs, tag = 'smem constant byte address 0x4 - core index']
  #allocation1 [shape = 'u32[144,128]{1,0:T(1,128)}', space=vmem, size = 0x12000, scoped, tag = 'internal scratch']
  %s0 = inlined_call_operand.hbm [shape: f32[16,32], index: 0, kind: input, shape index: {}]
  %s1 = inlined_call_operand.vmem [shape: f32[1,32], index: 1, kind: input, shape index: {}]
  %s2 = inlined_call_operand.vmem [shape: f32[1,32], index: 2, kind: input, shape index: {}]
  %s3 = inlined_call_operand.hbm [shape: f32[16,32], index: 3, kind: output, shape index: {}]
  %s4 = sld [smem:[#allocation0]]
  $region26: #{tpu_custom_call.1} parent=0
    _
  %s6 = ssub.s32 1, %s4
  %s7 = scalar_select 0, %s6, %s4
  $region1: #{tpu_custom_call.1} parent=0
    #allocation2 [shape = 'u8[8192]{0}', space=vmem, size = 0x2000, scoped, tag = 'input window, operand 0, single buffered']
    #allocation3 [shape = 's32[1]{0}', space=sflag, size = 0x4, scoped, tag = 'scoped memory for tpu_custom_call.1']
    #allocation4 [shape = 's32[1]{0}', space=sflag, size = 0x4, scoped, tag = 'scoped memory for tpu_custom_call.1']
    #allocation5 [shape = 'u8[8192]{0}', space=vmem, size = 0x2000, scoped, tag = 'output window, operand 0, single buffered']
    %8 = vsyncpa [#allocation3], 0
    %9 = vsyncpa [#allocation4], 0
    // Predicated region
    $region2: #{tpu_custom_call.1} parent=1 // pred_check
      _
    $region3: #{tpu_custom_call.1} parent=1 // pred_check_branch
      %11 = sbr.rel (0) target = $region5
    $region4: #{tpu_custom_call.1} parent=1 // pred_region
      %s13 = ssub.s32 256, 256
      %14 = vsyncadd [#allocation3], %s13
      %s15 = sshll.u32 [#allocation2], 4
      %s16 = int_to_ptr.vmem [resolvable:$true] %s15
      %21 = dma.hbm_to_vmem [thread:$0]  %s0, 256, %s16, [#allocation3], 128, 128, 8
    $region5: #{tpu_custom_call.1} parent=1 // pred_fallthru
      _
    // Predicated region
    $region6: #{tpu_custom_call.1} parent=1 // pred_check
      _
    $region7: #{tpu_custom_call.1} parent=1 // pred_check_branch
      %23 = sbr.rel (0) target = $region9
    $region8: #{tpu_custom_call.1} parent=1 // pred_region
      _
    $region9: #{tpu_custom_call.1} parent=1 // pred_fallthru
      _
    // Predicated region
    $region10: #{tpu_custom_call.1} parent=1 // pred_check
      _
    $region11: #{tpu_custom_call.1} parent=1 // pred_check_branch
      %25 = sbr.rel (0) target = $region13
    $region12: #{tpu_custom_call.1} parent=1 // pred_region
      _
    $region13: #{tpu_custom_call.1} parent=1 // pred_fallthru
      _
    // Predicated region
    $region14: #{tpu_custom_call.1} parent=1 // pred_check
      _
    $region15: #{tpu_custom_call.1} parent=1 // pred_check_branch
      %27 = sbr.rel (0) target = $region17
    $region16: #{tpu_custom_call.1} parent=1 // pred_region
      %28 = dma.done [#allocation3], 256
    $region17: #{tpu_custom_call.1} parent=1 // pred_fallthru
      _
    %v29 = vld [vmem:[#allocation2] sm:$0xff]
    %v30 = vld [vmem:[#allocation2 + $0x8] sm:$0xff]
    %vm31 = vcmask 261120
    %v32 = vsel %vm31, %v29, 0.0
    %33 = vadd.xlane.f32.xlu0 %v32
    %v34 = vpop.xlane.xlu0 %33
    %v35 = vsel %vm31, %v30, 0.0
    %36 = vadd.xlane.f32.xlu0 %v35
    %v37 = vpop.xlane.xlu0 %36
    %v38 = vmul.f32 %v34, 0.03125
    %v39 = vmul.f32 %v37, 0.03125
    %v40 = vsub.f32 %v29, %v38
    %v41 = vsub.f32 %v30, %v39
    %v42 = vmul.f32 %v40, %v40
    %v43 = vmul.f32 %v41, %v41
    %v44 = vsel %vm31, %v42, 0.0
    %45 = vadd.xlane.f32.xlu0 %v44
    %v46 = vpop.xlane.xlu0 %45
    %v47 = vsel %vm31, %v43, 0.0
    %48 = vadd.xlane.f32.xlu0 %v47
    %v49 = vpop.xlane.xlu0 %48
    %v50 = vmul.f32 %v46, 0.032258064
    %v51 = vmul.f32 %v49, 0.032258064
    %v52 = vrsqrt.pop %v50
    %v53 = vmul.f32 %v50, %v52
    %vm54 = vcmp.eq.f32.partialorder %v50, inf
    %v55 = vsel %vm54, %v50, %v53
    %vm56 = vcmp.eq.f32.partialorder %v50, 0.0
    %v57 = vand.u32 %v50, 2147483648
    %v58 = vsel %vm56, %v57, %v55
    %v59 = vrsqrt.pop %v51
    %v60 = vmul.f32 %v51, %v59
    %vm61 = vcmp.eq.f32.partialorder %v51, inf
    %v62 = vsel %vm61, %v51, %v60
    %vm63 = vcmp.eq.f32.partialorder %v51, 0.0
    %v64 = vand.u32 %v51, 2147483648
    %v65 = vsel %vm63, %v64, %v62
    %v66 = vadd.f32 %v58, 1e-12
    %v67 = vadd.f32 %v65, 1e-12
    %v68 = vrcp.pop %v66
    %v69 = vrcp.pop %v67
    %v70 = vld [vmem:[%s1] sm:$0x1]
    %v71 = vld [vmem:[%s2] sm:$0x1]
    %v72 = vmul.f32 %v40, %v68
    %v73 = vmul.f32 %v41, %v69
    %v75 = vlaneseq
    %v76 = vshrl.u32 %v75, 7
    %v77 = vsub.s32 0, %v76
    %v78 = vrot.slane %v70, %v77
    %v80 = vmul.f32 %v78, %v72
    %v81 = vmul.f32 %v78, %v73
    %v83 = vlaneseq
    %v84 = vshrl.u32 %v83, 7
    %v85 = vsub.s32 0, %v84
    %v86 = vrot.slane %v71, %v85
    %v88 = vadd.f32 %v80, %v86
    %v89 = vadd.f32 %v81, %v86
    %90 = vst.msk [vmem:[#allocation5] sm:$0xff] %vm31, %v88
    %91 = vst.msk [vmem:[#allocation5 + $0x8] sm:$0xff] %vm31, %v89
    // Predicated region
    $region18: #{tpu_custom_call.1} parent=1 // pred_check
      _
    $region19: #{tpu_custom_call.1} parent=1 // pred_check_branch
      %93 = sbr.rel (0) target = $region21
    $region20: #{tpu_custom_call.1} parent=1 // pred_region
      %s95 = ssub.s32 256, 256
      %96 = vsyncadd [#allocation4], %s95
      %s97 = sshll.u32 [#allocation5], 4
      %s98 = int_to_ptr.vmem [resolvable:$true] %s97
      %103 = dma.vmem_to_hbm [thread:$0]  %s98, 256, %s3, [#allocation4], 128, 128, 8
    $region21: #{tpu_custom_call.1} parent=1 // pred_fallthru
      _
    // Predicated region
    $region22: #{tpu_custom_call.1} parent=1 // pred_check
      _
    $region23: #{tpu_custom_call.1} parent=1 // pred_check_branch
      %105 = sbr.rel (0) target = $region25
    $region24: #{tpu_custom_call.1} parent=1 // pred_region
      %106 = dma.done [#allocation4], 256
    $region25: #{tpu_custom_call.1} parent=1 // pred_fallthru
      _
    %107 = vsyncpa [#allocation3], 1
    %108 = vsyncpa [#allocation4], 1

</llo_original>
